<compile_context>
chip_gen: v7x
topology: tpu7x:2x2x1
jax: 0.10.0
libtpu: 0.0.40
codegen_flags: <defaults>
</compile_context>

<pallas_src>
import jax
import jax.numpy as jnp
from jax import lax
from jax.experimental import pallas as pl
from jax.experimental.pallas import tpu as pltpu


_VMEM_SPEC = pl.BlockSpec(memory_space=pltpu.MemorySpace.VMEM)
_SMALL_BATCH_MAX = 512     # whole-array single-step path up to this batch size
_MAX_BATCH_BLOCK = 1024    # ceiling for the batch-parallel grid block


# ---------------------------------------------------------------------------
# Kernels
# ---------------------------------------------------------------------------

def _q1_compute(x_ref, w_ref, b_ref):
    """Shared MLP body. x_ref: (B, Fp) bf16 lane-dense, W: (6, Fp, Fp) bf16,
    b: (6, Fp) f32. Returns padded q of shape (B, Fp) in f32."""
    f32, bf16 = jnp.float32, jnp.bfloat16
    x = x_ref[...]                                 # (B, Fp) bf16
    b = b_ref[...]                                 # (6, Fp) f32

    def dot(a, i):
        # bf16 x bf16 -> f32 accumulate on the MXU; identical shape for all 6 layers.
        return jnp.dot(a, w_ref[i], preferred_element_type=f32) + b[i:i + 1, :]

    # features1 = relu(h1(x))   (padded lanes/rows of W/b/x are zero -> exact)
    f1 = jnp.maximum(dot(x, 0), 0.0)

    # rho_0 residual block
    h = jnp.maximum(dot(f1.astype(bf16), 1), 0.0)
    h = dot(h.astype(bf16), 2)
    f2 = jnp.maximum(h + f1, 0.0)

    # rho_1 residual block
    h = jnp.maximum(dot(f2.astype(bf16), 3), 0.0)
    h = dot(h.astype(bf16), 4)
    f3 = jnp.maximum(h + f2, 0.0)

    # output linear (padded lanes of W[5]/b[5] are zero -> padded q lanes are zero)
    return dot(f3.astype(bf16), 5)


def _q1_kernel(x_ref, w_ref, b_ref, q_ref):
    """q output path: lane-dense padded (B, Fp) store."""
    q_ref[...] = _q1_compute(x_ref, w_ref, b_ref)


def _q1_gather_kernel(x_ref, w_ref, b_ref, a_ref, qa_ref):
    """Fused action-gather path: emits q_acted (B, 1) directly."""
    q = _q1_compute(x_ref, w_ref, b_ref)                       # (B, Fp) f32
    col = lax.broadcasted_iota(jnp.int32, q.shape, 1)          # (B, Fp)
    sel = jnp.where(col == a_ref[...], q, 0.0)                 # a_ref: (B, 1) int32
    qa_ref[...] = jnp.sum(sel, axis=1, keepdims=True)


# ---------------------------------------------------------------------------
# Wrapper
# ---------------------------------------------------------------------------

def _choose_batch_block(B):
    """Multiple of 128, <= _MAX_BATCH_BLOCK, and guaranteeing >= 2 grid blocks
    (v7x dual TensorCore sharding of the 'parallel' batch axis)."""
    return min(_MAX_BATCH_BLOCK, max(128, ((B // 2) // 128) * 128))


def q1_forward(state, packed, action=None):
    """state: (B, 1, n_input) or (B, n_input). action: optional (B, 1) int."""
    x = jnp.squeeze(state, axis=1) if state.ndim == 3 else state
    x = x.astype(jnp.float32)
    B, n_input = x.shape

    W, bvec = packed["W"], packed["b"]
    n_output = packed["n_output"]
    Fp = W.shape[-1]

    # Lane-dense bf16 input slab (B, Fp): single clean DMA, all dots identical shape.
    xp = jnp.pad(x, ((0, 0), (0, Fp - n_input))).astype(jnp.bfloat16)

    flops = int(2 * B * 6 * Fp * Fp)
    bytes_accessed = int(2 * xp.size + 2 * W.size + 4 * bvec.size + 4 * B * Fp)
    cost = pl.CostEstimate(flops=flops, transcendentals=0,
                           bytes_accessed=bytes_accessed)

    use_grid = B > _SMALL_BATCH_MAX
    if use_grid:
        batch_block = _choose_batch_block(B)
        nb = pl.cdiv(B, batch_block)
        Bp = nb * batch_block
        if Bp != B:  # pad batch so large B never falls back to the whole-array path
            xp = jnp.pad(xp, ((0, Bp - B), (0, 0)))
    else:
        Bp = B

    if action is None:
        if not use_grid:
            # Tiny problem: no grid, whole arrays resident in VMEM, one DMA each.
            q_pad = pl.pallas_call(
                _q1_kernel,
                out_shape=jax.ShapeDtypeStruct((B, Fp), jnp.float32),
                in_specs=[_VMEM_SPEC] * 3,
                out_specs=_VMEM_SPEC,
                cost_estimate=cost,
            )(xp, W, bvec)
            return q_pad[:, :n_output]

        q_pad = pl.pallas_call(
            _q1_kernel,
            out_shape=jax.ShapeDtypeStruct((Bp, Fp), jnp.float32),
            grid=(nb,),
            in_specs=[
                pl.BlockSpec((batch_block, Fp), lambda i: (i, 0)),
                pl.BlockSpec((6, Fp, Fp), lambda i: (0, 0, 0)),   # constant index ->
                pl.BlockSpec((6, Fp), lambda i: (0, 0)),          # fetched once
            ],
            out_specs=pl.BlockSpec((batch_block, Fp), lambda i: (i, 0)),
            compiler_params=pltpu.CompilerParams(
                dimension_semantics=("parallel",)),
            cost_estimate=cost,
        )(xp, W, bvec)
        # Lane-dense kernel output; narrow view is cheap glue outside the kernel.
        return q_pad[:B, :n_output]

    # ----- fused action-gather path -----
    a = action.reshape(B, 1).astype(jnp.int32)
    if use_grid and Bp != B:
        a = jnp.pad(a, ((0, Bp - B), (0, 0)))

    if not use_grid:
        qa = pl.pallas_call(
            _q1_gather_kernel,
            out_shape=jax.ShapeDtypeStruct((B, 1), jnp.float32),
            in_specs=[_VMEM_SPEC] * 4,
            out_specs=_VMEM_SPEC,
            cost_estimate=cost,
        )(xp, W, bvec, a)
        return jnp.squeeze(qa, axis=1)

    qa = pl.pallas_call(
        _q1_gather_kernel,
        out_shape=jax.ShapeDtypeStruct((Bp, 1), jnp.float32),
        grid=(nb,),
        in_specs=[
            pl.BlockSpec((batch_block, Fp), lambda i: (i, 0)),
            pl.BlockSpec((6, Fp, Fp), lambda i: (0, 0, 0)),
            pl.BlockSpec((6, Fp), lambda i: (0, 0)),
            pl.BlockSpec((batch_block, 1), lambda i: (i, 0)),
        ],
        out_specs=pl.BlockSpec((batch_block, 1), lambda i: (i, 0)),
        compiler_params=pltpu.CompilerParams(
            dimension_semantics=("parallel",)),
        cost_estimate=cost,
    )(xp, W, bvec, a)
    return jnp.squeeze(qa[:B], axis=1)


# ---------------------------------------------------------------------------
# Parameter init / packing / reference
# ---------------------------------------------------------------------------

def init_params(key, n_input, n_features, n_output):
    """Deterministic parameter init mirroring the PyTorch module's shapes."""
    ks = jax.random.split(key, 6)

    def xavier_uniform(k, fan_in, fan_out, gain=1.0):
        limit = gain * jnp.sqrt(6.0 / (fan_in + fan_out))
        return jax.random.uniform(k, (fan_in, fan_out), jnp.float32, -limit, limit)

    relu_gain = jnp.sqrt(2.0)  # nn.init.calculate_gain('relu')
    return {
        "w1": xavier_uniform(ks[0], n_input, n_features, relu_gain),
        "b1": jnp.zeros((1, n_features), jnp.float32),
        "r0w1": xavier_uniform(ks[1], n_features, n_features, relu_gain),
        "r0b1": jnp.zeros((1, n_features), jnp.float32),
        "r0w2": xavier_uniform(ks[2], n_features, n_features, relu_gain),
        "r0b2": jnp.zeros((1, n_features), jnp.float32),
        "r1w1": xavier_uniform(ks[3], n_features, n_features, relu_gain),
        "r1b1": jnp.zeros((1, n_features), jnp.float32),
        "r1w2": xavier_uniform(ks[4], n_features, n_features, relu_gain),
        "r1b2": jnp.zeros((1, n_features), jnp.float32),
        "wo": xavier_uniform(ks[5], n_features, n_output, 1.0),
        "bo": jnp.zeros((1, n_output), jnp.float32),
    }


def pack_params(params, n_input, n_features, n_output):
    """Pack 12 tensors into one lane-dense bf16 weight slab + one f32 bias slab
    (done once at init, not per call)."""
    width = max(n_input, n_features, n_output)
    Fp = max(128, ((width + 127) // 128) * 128)

    def pad_w(w):
        r, c = w.shape
        return jnp.zeros((Fp, Fp), jnp.float32).at[:r, :c].set(w).astype(jnp.bfloat16)

    def pad_b(b):
        b = b.reshape(-1)
        return jnp.zeros((Fp,), jnp.float32).at[:b.shape[0]].set(b)

    W = jnp.stack([pad_w(params["w1"]),
                   pad_w(params["r0w1"]), pad_w(params["r0w2"]),
                   pad_w(params["r1w1"]), pad_w(params["r1w2"]),
                   pad_w(params["wo"])])
    b = jnp.stack([pad_b(params["b1"]),
                   pad_b(params["r0b1"]), pad_b(params["r0b2"]),
                   pad_b(params["r1b1"]), pad_b(params["r1b2"]),
                   pad_b(params["bo"])])
    return {"W": W, "b": b, "n_output": n_output}


def q1_reference(state, params, action=None, emulate_bf16=True):
    """Pure-JAX reference. emulate_bf16=True mirrors the kernel's bf16-operand /
    f32-accumulate matmuls so the comparison tolerance can stay tight."""
    x = (jnp.squeeze(state, axis=1) if state.ndim == 3 else state).astype(jnp.float32)
    bf16, f32 = jnp.bfloat16, jnp.float32

    def mm(a, w):
        if emulate_bf16:
            return jnp.dot(a.astype(bf16), w.astype(bf16), preferred_element_type=f32)
        return a @ w

    f1 = jax.nn.relu(mm(x, params["w1"]) + params["b1"])
    h = jax.nn.relu(mm(f1, params["r0w1"]) + params["r0b1"])
    h = mm(h, params["r0w2"]) + params["r0b2"]
    f2 = jax.nn.relu(h + f1)
    h = jax.nn.relu(mm(f2, params["r1w1"]) + params["r1b1"])
    h = mm(h, params["r1w2"]) + params["r1b2"]
    f3 = jax.nn.relu(h + f2)
    q = mm(f3, params["wo"]) + params["bo"]
    if action is None:
        return q
    return jnp.squeeze(jnp.take_along_axis(q, action.astype(jnp.int32), axis=1))


# ---------------------------------------------------------------------------
# Self-test
# ---------------------------------------------------------------------------

if __name__ == "__main__":
    key = jax.random.PRNGKey(0)
    ks = jax.random.split(key, 7)

    B, n_input, n_features, n_output = 8, 16, 32, 4
    params = init_params(ks[0], n_input, n_features, n_output)
    packed = pack_params(params, n_input, n_features, n_output)

    state = jax.random.normal(ks[1], (B, 1, n_input), jnp.float32)
    action = jax.random.randint(ks[2], (B, 1), 0, n_output)

    TOL = dict(atol=1e-2, rtol=1e-2)  # bf16-operand matmuls; f32 accumulation

    # action=None path (whole forward in one kernel, lane-dense padded output)
    q = jax.block_until_ready(q1_forward(state, packed))
    q_ref = q1_reference(state, params)
    assert q.shape == (B, n_output)
    assert jnp.allclose(q, q_ref, **TOL), float(jnp.max(jnp.abs(q - q_ref)))

    # action path (gather fused inside the kernel)
    qa = jax.block_until_ready(q1_forward(state, packed, action))
    qa_ref = q1_reference(state, params, action)
    assert qa.shape == (B,)
    assert jnp.allclose(qa, qa_ref, **TOL)

    # large batch, NOT divisible by the block -> padded batch-parallel grid path
    B2 = 1500
    state2 = jax.random.normal(ks[3], (B2, 1, n_input), jnp.float32)
    action2 = jax.random.randint(ks[4], (B2, 1), 0, n_output)

    q2 = jax.block_until_ready(q1_forward(state2, packed))
    q2_ref = q1_reference(state2, params)
    assert q2.shape == (B2, n_output)
    assert jnp.allclose(q2, q2_ref, **TOL)

    qa2 = jax.block_until_ready(q1_forward(state2, packed, action2))
    qa2_ref = q1_reference(state2, params, action2)
    assert qa2.shape == (B2,)
    assert jnp.allclose(qa2, qa2_ref, **TOL)

    # large batch divisible by the block -> exactly 2 parallel blocks (v7x dual-TC)
    B3 = 2048
    state3 = jax.random.normal(ks[5], (B3, 1, n_input), jnp.float32)
    q3 = jax.block_until_ready(q1_forward(state3, packed))
    q3_ref = q1_reference(state3, params)
    assert q3.shape == (B3, n_output)
    assert jnp.allclose(q3, q3_ref, **TOL)

    print("KERNEL_OK")
</pallas_src>

<mosaic_0001>
module attributes {stable_mosaic.version = 11 : i64} {
  func.func @_q1_kernel(%arg0: memref<8x128xbf16, #tpu.memory_space<vmem>>, %arg1: memref<6x128x128xbf16, #tpu.memory_space<vmem>>, %arg2: memref<6x128xf32, #tpu.memory_space<vmem>>, %arg3: memref<8x128xf32, #tpu.memory_space<vmem>>) attributes {dimension_semantics = [], scalar_prefetch = 0 : i64, scratch_operands = 0 : i64, tpu.core_type = #tpu.core_type<tc>} {
    %c0 = arith.constant 0 : index
    %c0_0 = arith.constant 0 : index
    %0 = vector.load %arg0[%c0, %c0_0] : memref<8x128xbf16, #tpu.memory_space<vmem>>, vector<8x128xbf16>
    %c0_1 = arith.constant 0 : index
    %c0_2 = arith.constant 0 : index
    %1 = vector.load %arg2[%c0_1, %c0_2] : memref<6x128xf32, #tpu.memory_space<vmem>>, vector<6x128xf32>
    %c0_3 = arith.constant 0 : index
    %c0_4 = arith.constant 0 : index
    %c0_5 = arith.constant 0 : index
    %2 = vector.load %arg1[%c0_3, %c0_4, %c0_5] : memref<6x128x128xbf16, #tpu.memory_space<vmem>>, vector<1x128x128xbf16>
    %3 = vector.shape_cast %2 : vector<1x128x128xbf16> to vector<128x128xbf16>
    %cst = arith.constant dense<0.000000e+00> : vector<8x128xf32>
    %4 = tpu.matmul %0, %3, %cst {dimension_numbers = #tpu.dot_dimension_numbers<[1], [0], [0], [1], [0, 0, 1, 1], [], []>} : vector<8x128xbf16>, vector<128x128xbf16>, vector<8x128xf32> -> vector<8x128xf32>
    %5 = vector.extract_strided_slice %1 {offsets = [0, 0], sizes = [1, 128], strides = [1, 1]} : vector<6x128xf32> to vector<1x128xf32>
    %6 = vector.broadcast %5 : vector<1x128xf32> to vector<8x128xf32>
    %7 = arith.addf %4, %6 : vector<8x128xf32>
    %cst_6 = arith.constant 0.000000e+00 : f32
    %8 = vector.broadcast %cst_6 : f32 to vector<8x128xf32>
    %9 = arith.maximumf %7, %8 : vector<8x128xf32>
    %10 = arith.truncf %9 : vector<8x128xf32> to vector<8x128xbf16>
    %c1 = arith.constant 1 : index
    %c0_7 = arith.constant 0 : index
    %c0_8 = arith.constant 0 : index
    %11 = vector.load %arg1[%c1, %c0_7, %c0_8] : memref<6x128x128xbf16, #tpu.memory_space<vmem>>, vector<1x128x128xbf16>
    %12 = vector.shape_cast %11 : vector<1x128x128xbf16> to vector<128x128xbf16>
    %cst_9 = arith.constant dense<0.000000e+00> : vector<8x128xf32>
    %13 = tpu.matmul %10, %12, %cst_9 {dimension_numbers = #tpu.dot_dimension_numbers<[1], [0], [0], [1], [0, 0, 1, 1], [], []>} : vector<8x128xbf16>, vector<128x128xbf16>, vector<8x128xf32> -> vector<8x128xf32>
    %14 = vector.extract_strided_slice %1 {offsets = [1, 0], sizes = [1, 128], strides = [1, 1]} : vector<6x128xf32> to vector<1x128xf32>
    %15 = vector.broadcast %14 : vector<1x128xf32> to vector<8x128xf32>
    %16 = arith.addf %13, %15 : vector<8x128xf32>
    %cst_10 = arith.constant 0.000000e+00 : f32
    %17 = vector.broadcast %cst_10 : f32 to vector<8x128xf32>
    %18 = arith.maximumf %16, %17 : vector<8x128xf32>
    %19 = arith.truncf %18 : vector<8x128xf32> to vector<8x128xbf16>
    %c2 = arith.constant 2 : index
    %c0_11 = arith.constant 0 : index
    %c0_12 = arith.constant 0 : index
    %20 = vector.load %arg1[%c2, %c0_11, %c0_12] : memref<6x128x128xbf16, #tpu.memory_space<vmem>>, vector<1x128x128xbf16>
    %21 = vector.shape_cast %20 : vector<1x128x128xbf16> to vector<128x128xbf16>
    %cst_13 = arith.constant dense<0.000000e+00> : vector<8x128xf32>
    %22 = tpu.matmul %19, %21, %cst_13 {dimension_numbers = #tpu.dot_dimension_numbers<[1], [0], [0], [1], [0, 0, 1, 1], [], []>} : vector<8x128xbf16>, vector<128x128xbf16>, vector<8x128xf32> -> vector<8x128xf32>
    %23 = vector.extract_strided_slice %1 {offsets = [2, 0], sizes = [1, 128], strides = [1, 1]} : vector<6x128xf32> to vector<1x128xf32>
    %24 = vector.broadcast %23 : vector<1x128xf32> to vector<8x128xf32>
    %25 = arith.addf %22, %24 : vector<8x128xf32>
    %26 = arith.addf %25, %9 : vector<8x128xf32>
    %cst_14 = arith.constant 0.000000e+00 : f32
    %27 = vector.broadcast %cst_14 : f32 to vector<8x128xf32>
    %28 = arith.maximumf %26, %27 : vector<8x128xf32>
    %29 = arith.truncf %28 : vector<8x128xf32> to vector<8x128xbf16>
    %c3 = arith.constant 3 : index
    %c0_15 = arith.constant 0 : index
    %c0_16 = arith.constant 0 : index
    %30 = vector.load %arg1[%c3, %c0_15, %c0_16] : memref<6x128x128xbf16, #tpu.memory_space<vmem>>, vector<1x128x128xbf16>
    %31 = vector.shape_cast %30 : vector<1x128x128xbf16> to vector<128x128xbf16>
    %cst_17 = arith.constant dense<0.000000e+00> : vector<8x128xf32>
    %32 = tpu.matmul %29, %31, %cst_17 {dimension_numbers = #tpu.dot_dimension_numbers<[1], [0], [0], [1], [0, 0, 1, 1], [], []>} : vector<8x128xbf16>, vector<128x128xbf16>, vector<8x128xf32> -> vector<8x128xf32>
    %33 = vector.extract_strided_slice %1 {offsets = [3, 0], sizes = [1, 128], strides = [1, 1]} : vector<6x128xf32> to vector<1x128xf32>
    %34 = vector.broadcast %33 : vector<1x128xf32> to vector<8x128xf32>
    %35 = arith.addf %32, %34 : vector<8x128xf32>
    %cst_18 = arith.constant 0.000000e+00 : f32
    %36 = vector.broadcast %cst_18 : f32 to vector<8x128xf32>
    %37 = arith.maximumf %35, %36 : vector<8x128xf32>
    %38 = arith.truncf %37 : vector<8x128xf32> to vector<8x128xbf16>
    %c4 = arith.constant 4 : index
    %c0_19 = arith.constant 0 : index
    %c0_20 = arith.constant 0 : index
    %39 = vector.load %arg1[%c4, %c0_19, %c0_20] : memref<6x128x128xbf16, #tpu.memory_space<vmem>>, vector<1x128x128xbf16>
    %40 = vector.shape_cast %39 : vector<1x128x128xbf16> to vector<128x128xbf16>
    %cst_21 = arith.constant dense<0.000000e+00> : vector<8x128xf32>
    %41 = tpu.matmul %38, %40, %cst_21 {dimension_numbers = #tpu.dot_dimension_numbers<[1], [0], [0], [1], [0, 0, 1, 1], [], []>} : vector<8x128xbf16>, vector<128x128xbf16>, vector<8x128xf32> -> vector<8x128xf32>
    %42 = vector.extract_strided_slice %1 {offsets = [4, 0], sizes = [1, 128], strides = [1, 1]} : vector<6x128xf32> to vector<1x128xf32>
    %43 = vector.broadcast %42 : vector<1x128xf32> to vector<8x128xf32>
    %44 = arith.addf %41, %43 : vector<8x128xf32>
    %45 = arith.addf %44, %28 : vector<8x128xf32>
    %cst_22 = arith.constant 0.000000e+00 : f32
    %46 = vector.broadcast %cst_22 : f32 to vector<8x128xf32>
    %47 = arith.maximumf %45, %46 : vector<8x128xf32>
    %48 = arith.truncf %47 : vector<8x128xf32> to vector<8x128xbf16>
    %c5 = arith.constant 5 : index
    %c0_23 = arith.constant 0 : index
    %c0_24 = arith.constant 0 : index
    %49 = vector.load %arg1[%c5, %c0_23, %c0_24] : memref<6x128x128xbf16, #tpu.memory_space<vmem>>, vector<1x128x128xbf16>
    %50 = vector.shape_cast %49 : vector<1x128x128xbf16> to vector<128x128xbf16>
    %cst_25 = arith.constant dense<0.000000e+00> : vector<8x128xf32>
    %51 = tpu.matmul %48, %50, %cst_25 {dimension_numbers = #tpu.dot_dimension_numbers<[1], [0], [0], [1], [0, 0, 1, 1], [], []>} : vector<8x128xbf16>, vector<128x128xbf16>, vector<8x128xf32> -> vector<8x128xf32>
    %52 = vector.extract_strided_slice %1 {offsets = [5, 0], sizes = [1, 128], strides = [1, 1]} : vector<6x128xf32> to vector<1x128xf32>
    %53 = vector.broadcast %52 : vector<1x128xf32> to vector<8x128xf32>
    %54 = arith.addf %51, %53 : vector<8x128xf32>
    %c0_26 = arith.constant 0 : index
    %c0_27 = arith.constant 0 : index
    %55 = vector.load %arg3[%c0_26, %c0_27] : memref<8x128xf32, #tpu.memory_space<vmem>>, vector<8x128xf32>
    tpu.vector_store %arg3[%c0_26, %c0_27], %54 {strides = array<i32>} : memref<8x128xf32, #tpu.memory_space<vmem>>, vector<8x128xf32>,
    return
  }
}

</mosaic_0001>

<llo_original>
// kernel: tpu_custom_call.1
$region0: #{tpu_custom_call.1}
  #allocation0 [shape = 'u32[]', space=smem, size = 0x4, offset = 0x4, fixed_abs, tag = 'smem constant byte address 0x4 - core index']
  #allocation1 [shape = 'u32[144,128]{1,0:T(1,128)}', space=vmem, size = 0x12000, scoped, tag = 'internal scratch']
  %s0 = inlined_call_operand.hbm [shape: bf16[8,128], index: 0, kind: input, shape index: {}]
  %s1 = inlined_call_operand.hbm [shape: bf16[6,128,128], index: 1, kind: input, shape index: {}]
  %s2 = inlined_call_operand.hbm [shape: f32[6,128], index: 2, kind: input, shape index: {}]
  %s3 = inlined_call_operand.hbm [shape: f32[8,128], index: 3, kind: output, shape index: {}]
  %s4 = sld [smem:[#allocation0]]
  $region34: #{tpu_custom_call.1} parent=0
    _
  %s6 = ssub.s32 1, %s4
  %s7 = scalar_select 0, %s6, %s4
  $region1: #{tpu_custom_call.1} parent=0
    #allocation2 [shape = 'u8[2048]{0}', space=vmem, size = 0x800, scoped, tag = 'input window, operand 0, single buffered']
    #allocation3 [shape = 's32[1]{0}', space=sflag, size = 0x4, scoped, tag = 'scoped memory for tpu_custom_call.1']
    #allocation4 [shape = 's32[1]{0}', space=sflag, size = 0x4, scoped, tag = 'scoped memory for tpu_custom_call.1']
    #allocation5 [shape = 'u8[196608]{0}', space=vmem, size = 0x30000, scoped, tag = 'input window, operand 1, single buffered']
    #allocation6 [shape = 's32[1]{0}', space=sflag, size = 0x4, scoped, tag = 'scoped memory for tpu_custom_call.1']
    #allocation7 [shape = 'u8[4096]{0}', space=vmem, size = 0x1000, scoped, tag = 'input window, operand 2, single buffered']
    #allocation8 [shape = 'u8[4096]{0}', space=vmem, size = 0x1000, scoped, tag = 'output window, operand 0, single buffered']
    %8 = vsyncpa [#allocation3], 0
    %9 = vsyncpa [#allocation6], 0
    %10 = vsyncpa [#allocation4], 0
    // Predicated region
    $region2: #{tpu_custom_call.1} parent=1 // pred_check
      _
    $region3: #{tpu_custom_call.1} parent=1 // pred_check_branch
      %12 = sbr.rel (0) target = $region5
    $region4: #{tpu_custom_call.1} parent=1 // pred_region
      %s14 = ssub.s32 64, 64
      %15 = vsyncadd [#allocation3], %s14
      %s17 = sshll.u32 [#allocation2], 4
      %s18 = int_to_ptr.vmem [resolvable:$true] %s17
      %20 = dma.hbm_to_vmem [thread:$0]  %s0, 64, %s18, [#allocation3]
    $region5: #{tpu_custom_call.1} parent=1 // pred_fallthru
      _
    // Predicated region
    $region6: #{tpu_custom_call.1} parent=1 // pred_check
      _
    $region7: #{tpu_custom_call.1} parent=1 // pred_check_branch
      %22 = sbr.rel (0) target = $region9
    $region8: #{tpu_custom_call.1} parent=1 // pred_region
      %s24 = ssub.s32 6144, 6144
      %25 = vsyncadd [#allocation6], %s24
      %s26 = sshll.u32 [#allocation5], 4
      %s27 = int_to_ptr.vmem [resolvable:$true] %s26
      %32 = dma.hbm_to_vmem [thread:$0]  %s1, 6144, %s27, [#allocation6], 64, 64, 4
    $region9: #{tpu_custom_call.1} parent=1 // pred_fallthru
      _
    // Predicated region
    $region10: #{tpu_custom_call.1} parent=1 // pred_check
      _
    $region11: #{tpu_custom_call.1} parent=1 // pred_check_branch
      %34 = sbr.rel (0) target = $region13
    $region12: #{tpu_custom_call.1} parent=1 // pred_region
      %s36 = ssub.s32 128, 128
      %37 = vsyncadd [#allocation6], %s36
      %s39 = sshll.u32 [#allocation7], 4
      %s40 = int_to_ptr.vmem [resolvable:$true] %s39
      %42 = dma.hbm_to_vmem [thread:$0]  %s2, 128, %s40, [#allocation6]
    $region13: #{tpu_custom_call.1} parent=1 // pred_fallthru
      _
    // Predicated region
    $region14: #{tpu_custom_call.1} parent=1 // pred_check
      _
    $region15: #{tpu_custom_call.1} parent=1 // pred_check_branch
      %44 = sbr.rel (0) target = $region17
    $region16: #{tpu_custom_call.1} parent=1 // pred_region
      %45 = dma.done [#allocation3], 64
    $region17: #{tpu_custom_call.1} parent=1 // pred_fallthru
      _
    // Predicated region
    $region18: #{tpu_custom_call.1} parent=1 // pred_check
      _
    $region19: #{tpu_custom_call.1} parent=1 // pred_check_branch
      %47 = sbr.rel (0) target = $region21
    $region20: #{tpu_custom_call.1} parent=1 // pred_region
      %48 = dma.done [#allocation6], 6144
    $region21: #{tpu_custom_call.1} parent=1 // pred_fallthru
      _
    // Predicated region
    $region22: #{tpu_custom_call.1} parent=1 // pred_check
      _
    $region23: #{tpu_custom_call.1} parent=1 // pred_check_branch
      %50 = sbr.rel (0) target = $region25
    $region24: #{tpu_custom_call.1} parent=1 // pred_region
      %51 = dma.done [#allocation6], 128
    $region25: #{tpu_custom_call.1} parent=1 // pred_fallthru
      _
    %v53 = vld [vmem:[#allocation2] sm:$0xf]
    %v54 = vld [vmem:[#allocation7] sm:$0x3f]
    %v55 = vld [vmem:[#allocation5] sm:$0xf]
    %v56 = vld [vmem:[#allocation5 + $0x4] sm:$0xf]
    %v57 = vld [vmem:[#allocation5 + $0x8] sm:$0xf]
    %v58 = vld [vmem:[#allocation5 + $0xc] sm:$0xf]
    %v59 = vld [vmem:[#allocation5 + $0x10] sm:$0xf]
    %v60 = vld [vmem:[#allocation5 + $0x14] sm:$0xf]
    %v61 = vld [vmem:[#allocation5 + $0x18] sm:$0xf]
    %v62 = vld [vmem:[#allocation5 + $0x1c] sm:$0xf]
    %v63 = vld [vmem:[#allocation5 + $0x20] sm:$0xf]
    %v64 = vld [vmem:[#allocation5 + $0x24] sm:$0xf]
    %v65 = vld [vmem:[#allocation5 + $0x28] sm:$0xf]
    %v66 = vld [vmem:[#allocation5 + $0x2c] sm:$0xf]
    %v67 = vld [vmem:[#allocation5 + $0x30] sm:$0xf]
    %v68 = vld [vmem:[#allocation5 + $0x34] sm:$0xf]
    %v69 = vld [vmem:[#allocation5 + $0x38] sm:$0xf]
    %v70 = vld [vmem:[#allocation5 + $0x3c] sm:$0xf]
    %v71 = vlaneseq
    %v72 = vshrl.u32 %v71, 7
    %v73 = vsub.s32 0, %v72
    %v74 = vrot.slane %v54, %v73
    %v91 = vunpack.c.l.b16 %v55
    %v92 = vunpack.c.l.b16 %v56
    %v93 = vunpack.c.l.b16 %v57
    %v94 = vunpack.c.l.b16 %v58
    %v95 = vunpack.c.l.b16 %v59
    %v96 = vunpack.c.l.b16 %v60
    %v97 = vunpack.c.l.b16 %v61
    %v98 = vunpack.c.l.b16 %v62
    %v99 = vunpack.c.l.b16 %v63
    %v100 = vunpack.c.l.b16 %v64
    %v101 = vunpack.c.l.b16 %v65
    %v102 = vunpack.c.l.b16 %v66
    %v103 = vunpack.c.l.b16 %v67
    %v104 = vunpack.c.l.b16 %v68
    %v105 = vunpack.c.l.b16 %v69
    %v106 = vunpack.c.l.b16 %v70
    %v107 = vpack.c.b16 %v92, %v91
    %v108 = vpack.c.b16 %v94, %v93
    %v109 = vpack.c.b16 %v96, %v95
    %v110 = vpack.c.b16 %v98, %v97
    %v111 = vpack.c.b16 %v100, %v99
    %v112 = vpack.c.b16 %v102, %v101
    %v113 = vpack.c.b16 %v104, %v103
    %v114 = vpack.c.b16 %v106, %v105
    %123 = vmatprep.subr.bf16.mxu0 0
    %124 = vmatpush1.bf16.msra.mxu0 %v107
    %125 = vmatprep.subr.bf16.mxu0 0
    %126 = vmatpush1.bf16.msra.mxu0 %v108
    %127 = vmatprep.subr.bf16.mxu0 0
    %128 = vmatpush1.bf16.msra.mxu0 %v109
    %129 = vmatprep.subr.bf16.mxu0 0
    %130 = vmatpush1.bf16.msra.mxu0 %v110
    %131 = vmatprep.subr.bf16.mxu0 0
    %132 = vmatpush1.bf16.msra.mxu0 %v111
    %133 = vmatprep.subr.bf16.mxu0 0
    %134 = vmatpush1.bf16.msra.mxu0 %v112
    %135 = vmatprep.subr.bf16.mxu0 0
    %136 = vmatpush1.bf16.msra.mxu0 %v113
    %137 = vmatprep.subr.bf16.mxu0 0
    %138 = vmatpush1.bf16.msra.mxu0 %v114
    %139 = vmatprep.subr.bf16.mxu0 0
    %140 = vmatpush1.bf16.msra.mxu0 0
    %141 = vmatprep.subr.bf16.mxu0 0
    %142 = vmatpush1.bf16.msra.mxu0 0
    %143 = vmatprep.subr.bf16.mxu0 0
    %144 = vmatpush1.bf16.msra.mxu0 0
    %145 = vmatprep.subr.bf16.mxu0 0
    %146 = vmatpush1.bf16.msra.mxu0 0
    %147 = vmatprep.subr.bf16.mxu0 0
    %148 = vmatpush1.bf16.msra.mxu0 0
    %149 = vmatprep.subr.bf16.mxu0 0
    %150 = vmatpush1.bf16.msra.mxu0 0
    %151 = vmatprep.subr.bf16.mxu0 0
    %152 = vmatpush1.bf16.msra.mxu0 0
    %153 = vmatprep.subr.bf16.mxu0 0
    %154 = vmatpush1.bf16.msra.mxu0 0
    %155 = vmatprep.mubr.bf16.mxu0 0
    %156 = vmatmul.mubr.bf16.gmra.mrb[0].mxu0 %v53
    %v157 = vpop.f32.mrb[0].mxu0
    %v158 = vadd.f32 %v74, %v157
    %v159 = vpop.f32.mrb[0].mxu0
    %v160 = vpop.f32.mrb[0].mxu0
    %v161 = vpop.f32.mrb[0].mxu0
    %162 = vdwg.mxu0
    %v163 = vmax.f32 %v158, 0.0
    %v164 = vpack.c.bf16 %v163, %v163
    %s165 = scalar_lea.vmem [#allocation5], 64
    %v166 = vld [vmem:[%s165] sm:$0xf]
    %v167 = vld [vmem:[%s165 + $0x4] sm:$0xf]
    %v168 = vld [vmem:[%s165 + $0x8] sm:$0xf]
    %v169 = vld [vmem:[%s165 + $0xc] sm:$0xf]
    %v170 = vld [vmem:[%s165 + $0x10] sm:$0xf]
    %v171 = vld [vmem:[%s165 + $0x14] sm:$0xf]
    %v172 = vld [vmem:[%s165 + $0x18] sm:$0xf]
    %v173 = vld [vmem:[%s165 + $0x1c] sm:$0xf]
    %v174 = vld [vmem:[%s165 + $0x20] sm:$0xf]
    %v175 = vld [vmem:[%s165 + $0x24] sm:$0xf]
    %v176 = vld [vmem:[%s165 + $0x28] sm:$0xf]
    %v177 = vld [vmem:[%s165 + $0x2c] sm:$0xf]
    %v178 = vld [vmem:[%s165 + $0x30] sm:$0xf]
    %v179 = vld [vmem:[%s165 + $0x34] sm:$0xf]
    %v180 = vld [vmem:[%s165 + $0x38] sm:$0xf]
    %v181 = vld [vmem:[%s165 + $0x3c] sm:$0xf]
    %v182 = vlaneseq
    %v183 = vshrl.u32 %v182, 7
    %v184 = vsub.s32 1, %v183
    %v185 = vrot.slane %v54, %v184
    %v202 = vunpack.c.l.b16 %v166
    %v203 = vunpack.c.l.b16 %v167
    %v204 = vunpack.c.l.b16 %v168
    %v205 = vunpack.c.l.b16 %v169
    %v206 = vunpack.c.l.b16 %v170
    %v207 = vunpack.c.l.b16 %v171
    %v208 = vunpack.c.l.b16 %v172
    %v209 = vunpack.c.l.b16 %v173
    %v210 = vunpack.c.l.b16 %v174
    %v211 = vunpack.c.l.b16 %v175
    %v212 = vunpack.c.l.b16 %v176
    %v213 = vunpack.c.l.b16 %v177
    %v214 = vunpack.c.l.b16 %v178
    %v215 = vunpack.c.l.b16 %v179
    %v216 = vunpack.c.l.b16 %v180
    %v217 = vunpack.c.l.b16 %v181
    %v218 = vpack.c.b16 %v203, %v202
    %v219 = vpack.c.b16 %v205, %v204
    %v220 = vpack.c.b16 %v207, %v206
    %v221 = vpack.c.b16 %v209, %v208
    %v222 = vpack.c.b16 %v211, %v210
    %v223 = vpack.c.b16 %v213, %v212
    %v224 = vpack.c.b16 %v215, %v214
    %v225 = vpack.c.b16 %v217, %v216
    %234 = vmatprep.subr.bf16.mxu0 0
    %235 = vmatpush1.bf16.msra.mxu0 %v218
    %236 = vmatprep.subr.bf16.mxu0 0
    %237 = vmatpush1.bf16.msra.mxu0 %v219
    %238 = vmatprep.subr.bf16.mxu0 0
    %239 = vmatpush1.bf16.msra.mxu0 %v220
    %240 = vmatprep.subr.bf16.mxu0 0
    %241 = vmatpush1.bf16.msra.mxu0 %v221
    %242 = vmatprep.subr.bf16.mxu0 0
    %243 = vmatpush1.bf16.msra.mxu0 %v222
    %244 = vmatprep.subr.bf16.mxu0 0
    %245 = vmatpush1.bf16.msra.mxu0 %v223
    %246 = vmatprep.subr.bf16.mxu0 0
    %247 = vmatpush1.bf16.msra.mxu0 %v224
    %248 = vmatprep.subr.bf16.mxu0 0
    %249 = vmatpush1.bf16.msra.mxu0 %v225
    %250 = vmatprep.subr.bf16.mxu0 0
    %251 = vmatpush1.bf16.msra.mxu0 0
    %252 = vmatprep.subr.bf16.mxu0 0
    %253 = vmatpush1.bf16.msra.mxu0 0
    %254 = vmatprep.subr.bf16.mxu0 0
    %255 = vmatpush1.bf16.msra.mxu0 0
    %256 = vmatprep.subr.bf16.mxu0 0
    %257 = vmatpush1.bf16.msra.mxu0 0
    %258 = vmatprep.subr.bf16.mxu0 0
    %259 = vmatpush1.bf16.msra.mxu0 0
    %260 = vmatprep.subr.bf16.mxu0 0
    %261 = vmatpush1.bf16.msra.mxu0 0
    %262 = vmatprep.subr.bf16.mxu0 0
    %263 = vmatpush1.bf16.msra.mxu0 0
    %264 = vmatprep.subr.bf16.mxu0 0
    %265 = vmatpush1.bf16.msra.mxu0 0
    %266 = vmatprep.mubr.bf16.mxu0 0
    %267 = vmatmul.mubr.bf16.gmra.mrb[0].mxu0 %v164
    %v268 = vpop.f32.mrb[0].mxu0
    %v269 = vadd.f32 %v185, %v268
    %v270 = vpop.f32.mrb[0].mxu0
    %v271 = vpop.f32.mrb[0].mxu0
    %v272 = vpop.f32.mrb[0].mxu0
    %273 = vdwg.mxu0
    %v274 = vmax.f32 %v269, 0.0
    %v275 = vpack.c.bf16 %v274, %v274
    %s276 = scalar_lea.vmem [#allocation5], 128
    %v277 = vld [vmem:[%s276] sm:$0xf]
    %v278 = vld [vmem:[%s276 + $0x4] sm:$0xf]
    %v279 = vld [vmem:[%s276 + $0x8] sm:$0xf]
    %v280 = vld [vmem:[%s276 + $0xc] sm:$0xf]
    %v281 = vld [vmem:[%s276 + $0x10] sm:$0xf]
    %v282 = vld [vmem:[%s276 + $0x14] sm:$0xf]
    %v283 = vld [vmem:[%s276 + $0x18] sm:$0xf]
    %v284 = vld [vmem:[%s276 + $0x1c] sm:$0xf]
    %v285 = vld [vmem:[%s276 + $0x20] sm:$0xf]
    %v286 = vld [vmem:[%s276 + $0x24] sm:$0xf]
    %v287 = vld [vmem:[%s276 + $0x28] sm:$0xf]
    %v288 = vld [vmem:[%s276 + $0x2c] sm:$0xf]
    %v289 = vld [vmem:[%s276 + $0x30] sm:$0xf]
    %v290 = vld [vmem:[%s276 + $0x34] sm:$0xf]
    %v291 = vld [vmem:[%s276 + $0x38] sm:$0xf]
    %v292 = vld [vmem:[%s276 + $0x3c] sm:$0xf]
    %v293 = vlaneseq
    %v294 = vshrl.u32 %v293, 7
    %v295 = vsub.s32 2, %v294
    %v296 = vrot.slane %v54, %v295
    %v313 = vunpack.c.l.b16 %v277
    %v314 = vunpack.c.l.b16 %v278
    %v315 = vunpack.c.l.b16 %v279
    %v316 = vunpack.c.l.b16 %v280
    %v317 = vunpack.c.l.b16 %v281
    %v318 = vunpack.c.l.b16 %v282
    %v319 = vunpack.c.l.b16 %v283
    %v320 = vunpack.c.l.b16 %v284
    %v321 = vunpack.c.l.b16 %v285
    %v322 = vunpack.c.l.b16 %v286
    %v323 = vunpack.c.l.b16 %v287
    %v324 = vunpack.c.l.b16 %v288
    %v325 = vunpack.c.l.b16 %v289
    %v326 = vunpack.c.l.b16 %v290
    %v327 = vunpack.c.l.b16 %v291
    %v328 = vunpack.c.l.b16 %v292
    %v329 = vpack.c.b16 %v314, %v313
    %v330 = vpack.c.b16 %v316, %v315
    %v331 = vpack.c.b16 %v318, %v317
    %v332 = vpack.c.b16 %v320, %v319
    %v333 = vpack.c.b16 %v322, %v321
    %v334 = vpack.c.b16 %v324, %v323
    %v335 = vpack.c.b16 %v326, %v325
    %v336 = vpack.c.b16 %v328, %v327
    %345 = vmatprep.subr.bf16.mxu0 0
    %346 = vmatpush1.bf16.msra.mxu0 %v329
    %347 = vmatprep.subr.bf16.mxu0 0
    %348 = vmatpush1.bf16.msra.mxu0 %v330
    %349 = vmatprep.subr.bf16.mxu0 0
    %350 = vmatpush1.bf16.msra.mxu0 %v331
    %351 = vmatprep.subr.bf16.mxu0 0
    %352 = vmatpush1.bf16.msra.mxu0 %v332
    %353 = vmatprep.subr.bf16.mxu0 0
    %354 = vmatpush1.bf16.msra.mxu0 %v333
    %355 = vmatprep.subr.bf16.mxu0 0
    %356 = vmatpush1.bf16.msra.mxu0 %v334
    %357 = vmatprep.subr.bf16.mxu0 0
    %358 = vmatpush1.bf16.msra.mxu0 %v335
    %359 = vmatprep.subr.bf16.mxu0 0
    %360 = vmatpush1.bf16.msra.mxu0 %v336
    %361 = vmatprep.subr.bf16.mxu0 0
    %362 = vmatpush1.bf16.msra.mxu0 0
    %363 = vmatprep.subr.bf16.mxu0 0
    %364 = vmatpush1.bf16.msra.mxu0 0
    %365 = vmatprep.subr.bf16.mxu0 0
    %366 = vmatpush1.bf16.msra.mxu0 0
    %367 = vmatprep.subr.bf16.mxu0 0
    %368 = vmatpush1.bf16.msra.mxu0 0
    %369 = vmatprep.subr.bf16.mxu0 0
    %370 = vmatpush1.bf16.msra.mxu0 0
    %371 = vmatprep.subr.bf16.mxu0 0
    %372 = vmatpush1.bf16.msra.mxu0 0
    %373 = vmatprep.subr.bf16.mxu0 0
    %374 = vmatpush1.bf16.msra.mxu0 0
    %375 = vmatprep.subr.bf16.mxu0 0
    %376 = vmatpush1.bf16.msra.mxu0 0
    %377 = vmatprep.mubr.bf16.mxu0 0
    %378 = vmatmul.mubr.bf16.gmra.mrb[0].mxu0 %v275
    %v379 = vpop.f32.mrb[0].mxu0
    %v380 = vadd.f32 %v296, %v379
    %v381 = vpop.f32.mrb[0].mxu0
    %v382 = vpop.f32.mrb[0].mxu0
    %v383 = vpop.f32.mrb[0].mxu0
    %384 = vdwg.mxu0
    %v385 = vadd.f32 %v380, %v163
    %v386 = vmax.f32 %v385, 0.0
    %v387 = vpack.c.bf16 %v386, %v386
    %s388 = scalar_lea.vmem [#allocation5], 192
    %v389 = vld [vmem:[%s388] sm:$0xf]
    %v390 = vld [vmem:[%s388 + $0x4] sm:$0xf]
    %v391 = vld [vmem:[%s388 + $0x8] sm:$0xf]
    %v392 = vld [vmem:[%s388 + $0xc] sm:$0xf]
    %v393 = vld [vmem:[%s388 + $0x10] sm:$0xf]
    %v394 = vld [vmem:[%s388 + $0x14] sm:$0xf]
    %v395 = vld [vmem:[%s388 + $0x18] sm:$0xf]
    %v396 = vld [vmem:[%s388 + $0x1c] sm:$0xf]
    %v397 = vld [vmem:[%s388 + $0x20] sm:$0xf]
    %v398 = vld [vmem:[%s388 + $0x24] sm:$0xf]
    %v399 = vld [vmem:[%s388 + $0x28] sm:$0xf]
    %v400 = vld [vmem:[%s388 + $0x2c] sm:$0xf]
    %v401 = vld [vmem:[%s388 + $0x30] sm:$0xf]
    %v402 = vld [vmem:[%s388 + $0x34] sm:$0xf]
    %v403 = vld [vmem:[%s388 + $0x38] sm:$0xf]
    %v404 = vld [vmem:[%s388 + $0x3c] sm:$0xf]
    %v405 = vlaneseq
    %v406 = vshrl.u32 %v405, 7
    %v407 = vsub.s32 3, %v406
    %v408 = vrot.slane %v54, %v407
    %v425 = vunpack.c.l.b16 %v389
    %v426 = vunpack.c.l.b16 %v390
    %v427 = vunpack.c.l.b16 %v391
    %v428 = vunpack.c.l.b16 %v392
    %v429 = vunpack.c.l.b16 %v393
    %v430 = vunpack.c.l.b16 %v394
    %v431 = vunpack.c.l.b16 %v395
    %v432 = vunpack.c.l.b16 %v396
    %v433 = vunpack.c.l.b16 %v397
    %v434 = vunpack.c.l.b16 %v398
    %v435 = vunpack.c.l.b16 %v399
    %v436 = vunpack.c.l.b16 %v400
    %v437 = vunpack.c.l.b16 %v401
    %v438 = vunpack.c.l.b16 %v402
    %v439 = vunpack.c.l.b16 %v403
    %v440 = vunpack.c.l.b16 %v404
    %v441 = vpack.c.b16 %v426, %v425
    %v442 = vpack.c.b16 %v428, %v427
    %v443 = vpack.c.b16 %v430, %v429
    %v444 = vpack.c.b16 %v432, %v431
    %v445 = vpack.c.b16 %v434, %v433
    %v446 = vpack.c.b16 %v436, %v435
    %v447 = vpack.c.b16 %v438, %v437
    %v448 = vpack.c.b16 %v440, %v439
    %457 = vmatprep.subr.bf16.mxu0 0
    %458 = vmatpush1.bf16.msra.mxu0 %v441
    %459 = vmatprep.subr.bf16.mxu0 0
    %460 = vmatpush1.bf16.msra.mxu0 %v442
    %461 = vmatprep.subr.bf16.mxu0 0
    %462 = vmatpush1.bf16.msra.mxu0 %v443
    %463 = vmatprep.subr.bf16.mxu0 0
    %464 = vmatpush1.bf16.msra.mxu0 %v444
    %465 = vmatprep.subr.bf16.mxu0 0
    %466 = vmatpush1.bf16.msra.mxu0 %v445
    %467 = vmatprep.subr.bf16.mxu0 0
    %468 = vmatpush1.bf16.msra.mxu0 %v446
    %469 = vmatprep.subr.bf16.mxu0 0
    %470 = vmatpush1.bf16.msra.mxu0 %v447
    %471 = vmatprep.subr.bf16.mxu0 0
    %472 = vmatpush1.bf16.msra.mxu0 %v448
    %473 = vmatprep.subr.bf16.mxu0 0
    %474 = vmatpush1.bf16.msra.mxu0 0
    %475 = vmatprep.subr.bf16.mxu0 0
    %476 = vmatpush1.bf16.msra.mxu0 0
    %477 = vmatprep.subr.bf16.mxu0 0
    %478 = vmatpush1.bf16.msra.mxu0 0
    %479 = vmatprep.subr.bf16.mxu0 0
    %480 = vmatpush1.bf16.msra.mxu0 0
    %481 = vmatprep.subr.bf16.mxu0 0
    %482 = vmatpush1.bf16.msra.mxu0 0
    %483 = vmatprep.subr.bf16.mxu0 0
    %484 = vmatpush1.bf16.msra.mxu0 0
    %485 = vmatprep.subr.bf16.mxu0 0
    %486 = vmatpush1.bf16.msra.mxu0 0
    %487 = vmatprep.subr.bf16.mxu0 0
    %488 = vmatpush1.bf16.msra.mxu0 0
    %489 = vmatprep.mubr.bf16.mxu0 0
    %490 = vmatmul.mubr.bf16.gmra.mrb[0].mxu0 %v387
    %v491 = vpop.f32.mrb[0].mxu0
    %v492 = vadd.f32 %v408, %v491
    %v493 = vpop.f32.mrb[0].mxu0
    %v494 = vpop.f32.mrb[0].mxu0
    %v495 = vpop.f32.mrb[0].mxu0
    %496 = vdwg.mxu0
    %v497 = vmax.f32 %v492, 0.0
    %v498 = vpack.c.bf16 %v497, %v497
    %s499 = scalar_lea.vmem [#allocation5], 256
    %v500 = vld [vmem:[%s499] sm:$0xf]
    %v501 = vld [vmem:[%s499 + $0x4] sm:$0xf]
    %v502 = vld [vmem:[%s499 + $0x8] sm:$0xf]
    %v503 = vld [vmem:[%s499 + $0xc] sm:$0xf]
    %v504 = vld [vmem:[%s499 + $0x10] sm:$0xf]
    %v505 = vld [vmem:[%s499 + $0x14] sm:$0xf]
    %v506 = vld [vmem:[%s499 + $0x18] sm:$0xf]
    %v507 = vld [vmem:[%s499 + $0x1c] sm:$0xf]
    %v508 = vld [vmem:[%s499 + $0x20] sm:$0xf]
    %v509 = vld [vmem:[%s499 + $0x24] sm:$0xf]
    %v510 = vld [vmem:[%s499 + $0x28] sm:$0xf]
    %v511 = vld [vmem:[%s499 + $0x2c] sm:$0xf]
    %v512 = vld [vmem:[%s499 + $0x30] sm:$0xf]
    %v513 = vld [vmem:[%s499 + $0x34] sm:$0xf]
    %v514 = vld [vmem:[%s499 + $0x38] sm:$0xf]
    %v515 = vld [vmem:[%s499 + $0x3c] sm:$0xf]
    %v516 = vlaneseq
    %v517 = vshrl.u32 %v516, 7
    %v518 = vsub.s32 4, %v517
    %v519 = vrot.slane %v54, %v518
    %v536 = vunpack.c.l.b16 %v500
    %v537 = vunpack.c.l.b16 %v501
    %v538 = vunpack.c.l.b16 %v502
    %v539 = vunpack.c.l.b16 %v503
    %v540 = vunpack.c.l.b16 %v504
    %v541 = vunpack.c.l.b16 %v505
    %v542 = vunpack.c.l.b16 %v506
    %v543 = vunpack.c.l.b16 %v507
    %v544 = vunpack.c.l.b16 %v508
    %v545 = vunpack.c.l.b16 %v509
    %v546 = vunpack.c.l.b16 %v510
    %v547 = vunpack.c.l.b16 %v511
    %v548 = vunpack.c.l.b16 %v512
    %v549 = vunpack.c.l.b16 %v513
    %v550 = vunpack.c.l.b16 %v514
    %v551 = vunpack.c.l.b16 %v515
    %v552 = vpack.c.b16 %v537, %v536
    %v553 = vpack.c.b16 %v539, %v538
    %v554 = vpack.c.b16 %v541, %v540
    %v555 = vpack.c.b16 %v543, %v542
    %v556 = vpack.c.b16 %v545, %v544
    %v557 = vpack.c.b16 %v547, %v546
    %v558 = vpack.c.b16 %v549, %v548
    %v559 = vpack.c.b16 %v551, %v550
    %568 = vmatprep.subr.bf16.mxu0 0
    %569 = vmatpush1.bf16.msra.mxu0 %v552
    %570 = vmatprep.subr.bf16.mxu0 0
    %571 = vmatpush1.bf16.msra.mxu0 %v553
    %572 = vmatprep.subr.bf16.mxu0 0
    %573 = vmatpush1.bf16.msra.mxu0 %v554
    %574 = vmatprep.subr.bf16.mxu0 0
    %575 = vmatpush1.bf16.msra.mxu0 %v555
    %576 = vmatprep.subr.bf16.mxu0 0
    %577 = vmatpush1.bf16.msra.mxu0 %v556
    %578 = vmatprep.subr.bf16.mxu0 0
    %579 = vmatpush1.bf16.msra.mxu0 %v557
    %580 = vmatprep.subr.bf16.mxu0 0
    %581 = vmatpush1.bf16.msra.mxu0 %v558
    %582 = vmatprep.subr.bf16.mxu0 0
    %583 = vmatpush1.bf16.msra.mxu0 %v559
    %584 = vmatprep.subr.bf16.mxu0 0
    %585 = vmatpush1.bf16.msra.mxu0 0
    %586 = vmatprep.subr.bf16.mxu0 0
    %587 = vmatpush1.bf16.msra.mxu0 0
    %588 = vmatprep.subr.bf16.mxu0 0
    %589 = vmatpush1.bf16.msra.mxu0 0
    %590 = vmatprep.subr.bf16.mxu0 0
    %591 = vmatpush1.bf16.msra.mxu0 0
    %592 = vmatprep.subr.bf16.mxu0 0
    %593 = vmatpush1.bf16.msra.mxu0 0
    %594 = vmatprep.subr.bf16.mxu0 0
    %595 = vmatpush1.bf16.msra.mxu0 0
    %596 = vmatprep.subr.bf16.mxu0 0
    %597 = vmatpush1.bf16.msra.mxu0 0
    %598 = vmatprep.subr.bf16.mxu0 0
    %599 = vmatpush1.bf16.msra.mxu0 0
    %600 = vmatprep.mubr.bf16.mxu0 0
    %601 = vmatmul.mubr.bf16.gmra.mrb[0].mxu0 %v498
    %v602 = vpop.f32.mrb[0].mxu0
    %v603 = vadd.f32 %v519, %v602
    %v604 = vpop.f32.mrb[0].mxu0
    %v605 = vpop.f32.mrb[0].mxu0
    %v606 = vpop.f32.mrb[0].mxu0
    %607 = vdwg.mxu0
    %v608 = vadd.f32 %v603, %v386
    %v609 = vmax.f32 %v608, 0.0
    %v610 = vpack.c.bf16 %v609, %v609
    %s611 = scalar_lea.vmem [#allocation5], 320
    %v612 = vld [vmem:[%s611] sm:$0xf]
    %v613 = vld [vmem:[%s611 + $0x4] sm:$0xf]
    %v614 = vld [vmem:[%s611 + $0x8] sm:$0xf]
    %v615 = vld [vmem:[%s611 + $0xc] sm:$0xf]
    %v616 = vld [vmem:[%s611 + $0x10] sm:$0xf]
    %v617 = vld [vmem:[%s611 + $0x14] sm:$0xf]
    %v618 = vld [vmem:[%s611 + $0x18] sm:$0xf]
    %v619 = vld [vmem:[%s611 + $0x1c] sm:$0xf]
    %v620 = vld [vmem:[%s611 + $0x20] sm:$0xf]
    %v621 = vld [vmem:[%s611 + $0x24] sm:$0xf]
    %v622 = vld [vmem:[%s611 + $0x28] sm:$0xf]
    %v623 = vld [vmem:[%s611 + $0x2c] sm:$0xf]
    %v624 = vld [vmem:[%s611 + $0x30] sm:$0xf]
    %v625 = vld [vmem:[%s611 + $0x34] sm:$0xf]
    %v626 = vld [vmem:[%s611 + $0x38] sm:$0xf]
    %v627 = vld [vmem:[%s611 + $0x3c] sm:$0xf]
    %v628 = vlaneseq
    %v629 = vshrl.u32 %v628, 7
    %v630 = vsub.s32 5, %v629
    %v631 = vrot.slane %v54, %v630
    %v648 = vunpack.c.l.b16 %v612
    %v649 = vunpack.c.l.b16 %v613
    %v650 = vunpack.c.l.b16 %v614
    %v651 = vunpack.c.l.b16 %v615
    %v652 = vunpack.c.l.b16 %v616
    %v653 = vunpack.c.l.b16 %v617
    %v654 = vunpack.c.l.b16 %v618
    %v655 = vunpack.c.l.b16 %v619
    %v656 = vunpack.c.l.b16 %v620
    %v657 = vunpack.c.l.b16 %v621
    %v658 = vunpack.c.l.b16 %v622
    %v659 = vunpack.c.l.b16 %v623
    %v660 = vunpack.c.l.b16 %v624
    %v661 = vunpack.c.l.b16 %v625
    %v662 = vunpack.c.l.b16 %v626
    %v663 = vunpack.c.l.b16 %v627
    %v664 = vpack.c.b16 %v649, %v648
    %v665 = vpack.c.b16 %v651, %v650
    %v666 = vpack.c.b16 %v653, %v652
    %v667 = vpack.c.b16 %v655, %v654
    %v668 = vpack.c.b16 %v657, %v656
    %v669 = vpack.c.b16 %v659, %v658
    %v670 = vpack.c.b16 %v661, %v660
    %v671 = vpack.c.b16 %v663, %v662
    %680 = vmatprep.subr.bf16.mxu0 0
    %681 = vmatpush1.bf16.msra.mxu0 %v664
    %682 = vmatprep.subr.bf16.mxu0 0
    %683 = vmatpush1.bf16.msra.mxu0 %v665
    %684 = vmatprep.subr.bf16.mxu0 0
    %685 = vmatpush1.bf16.msra.mxu0 %v666
    %686 = vmatprep.subr.bf16.mxu0 0
    %687 = vmatpush1.bf16.msra.mxu0 %v667
    %688 = vmatprep.subr.bf16.mxu0 0
    %689 = vmatpush1.bf16.msra.mxu0 %v668
    %690 = vmatprep.subr.bf16.mxu0 0
    %691 = vmatpush1.bf16.msra.mxu0 %v669
    %692 = vmatprep.subr.bf16.mxu0 0
    %693 = vmatpush1.bf16.msra.mxu0 %v670
    %694 = vmatprep.subr.bf16.mxu0 0
    %695 = vmatpush1.bf16.msra.mxu0 %v671
    %696 = vmatprep.subr.bf16.mxu0 0
    %697 = vmatpush1.bf16.msra.mxu0 0
    %698 = vmatprep.subr.bf16.mxu0 0
    %699 = vmatpush1.bf16.msra.mxu0 0
    %700 = vmatprep.subr.bf16.mxu0 0
    %701 = vmatpush1.bf16.msra.mxu0 0
    %702 = vmatprep.subr.bf16.mxu0 0
    %703 = vmatpush1.bf16.msra.mxu0 0
    %704 = vmatprep.subr.bf16.mxu0 0
    %705 = vmatpush1.bf16.msra.mxu0 0
    %706 = vmatprep.subr.bf16.mxu0 0
    %707 = vmatpush1.bf16.msra.mxu0 0
    %708 = vmatprep.subr.bf16.mxu0 0
    %709 = vmatpush1.bf16.msra.mxu0 0
    %710 = vmatprep.subr.bf16.mxu0 0
    %711 = vmatpush1.bf16.msra.mxu0 0
    %712 = vmatprep.mubr.bf16.mxu0 0
    %713 = vmatmul.mubr.bf16.gmra.mrb[0].mxu0 %v610
    %v714 = vpop.f32.mrb[0].mxu0
    %v715 = vadd.f32 %v631, %v714
    %v716 = vpop.f32.mrb[0].mxu0
    %v717 = vpop.f32.mrb[0].mxu0
    %v718 = vpop.f32.mrb[0].mxu0
    %719 = vdwg.mxu0
    %720 = vst [vmem:[#allocation8] sm:$0xff] %v715
    // Predicated region
    $region26: #{tpu_custom_call.1} parent=1 // pred_check
      _
    $region27: #{tpu_custom_call.1} parent=1 // pred_check_branch
      %722 = sbr.rel (0) target = $region29
    $region28: #{tpu_custom_call.1} parent=1 // pred_region
      %s724 = ssub.s32 128, 128
      %725 = vsyncadd [#allocation4], %s724
      %s727 = sshll.u32 [#allocation8], 4
      %s728 = int_to_ptr.vmem [resolvable:$true] %s727
      %730 = dma.vmem_to_hbm [thread:$0]  %s728, 128, %s3, [#allocation4]
    $region29: #{tpu_custom_call.1} parent=1 // pred_fallthru
      _
    // Predicated region
    $region30: #{tpu_custom_call.1} parent=1 // pred_check
      _
    $region31: #{tpu_custom_call.1} parent=1 // pred_check_branch
      %732 = sbr.rel (0) target = $region33
    $region32: #{tpu_custom_call.1} parent=1 // pred_region
      %733 = dma.done [#allocation4], 128
    $region33: #{tpu_custom_call.1} parent=1 // pred_fallthru
      _
    %734 = vsyncpa [#allocation3], 1
    %735 = vsyncpa [#allocation6], 1
    %736 = vsyncpa [#allocation4], 1

</llo_original>
